<compile_context>
chip_gen: v5e
topology: v5e:2x2
jax: 0.10.0
libtpu: 0.0.40
codegen_flags: <defaults>
</compile_context>

<pallas_src>
import functools

import jax
import jax.numpy as jnp
from jax import lax
from jax.experimental import pallas as pl
from jax.experimental.pallas import tpu as pltpu

_LANES = 128
# 4096 rows * 128 lanes * 4 B = 2 MiB per input per pipeline buffer
# (2 inputs x 2 buffers = 8 MiB VMEM -> inside v5e's 16 MiB scoped default).
_DEFAULT_BLOCK_ROWS = 4096
# Leading 'parallel' grid axis: shards the block stream across both
# TensorCores on v7x (harmless sequential outer iteration on 1-TC v5e/v6e).
_NUM_SPLITS = 2


def _focal_loss_kernel(logits_ref, targets_ref, out_ref, *,
                       n_valid, block_rows, blocks_per_split,
                       alpha_neg, alpha_pos, use_alpha, gamma):
    s = pl.program_id(0)          # parallel split (a TensorCore on v7x)
    b = pl.program_id(1)          # sequential block stream within the split

    # Per-split (8,128) accumulator lives directly in the resident output
    # block (its block index is constant across the 'arbitrary' b axis).
    @pl.when(b == 0)
    def _():
        out_ref[...] = jnp.zeros_like(out_ref)

    # Upcast in-kernel so narrow input dtypes (bf16 logits, int8 targets)
    # only pay their native byte width over HBM/DMA.
    x = logits_ref[...].astype(jnp.float32)       # (block_rows, 128)
    t = targets_ref[...].astype(jnp.float32)

    # sigmoid = 1 / (1 + exp(-x)) with an approximate EUP reciprocal:
    # exp + vrcp (2 EUP pushes) instead of exp + full-precision divide.
    # The 1e-6 clip bounds the downstream log against the ~1e-4 vrcp error.
    probs = pl.reciprocal(1.0 + jnp.exp(-x), approx=True)
    probs = jnp.clip(probs, 1e-06, 1.0 - 1e-06)

    is_pos = t == 1.0
    pt = jnp.where(is_pos, probs, 1.0 - probs)
    one_m_pt = 1.0 - pt

    # (1 - pt) ** gamma, specialised at trace time.
    if gamma == 0.5:
        mod = jnp.sqrt(one_m_pt)                  # single EUP op
    elif float(gamma).is_integer() and 0 <= int(gamma) <= 4:
        g = int(gamma)
        if g == 0:
            mod = jnp.ones_like(one_m_pt)
        else:
            mod = one_m_pt
            for _ in range(g - 1):
                mod = mod * one_m_pt              # cheap VPU multiplies
    else:
        mod = one_m_pt ** gamma                   # generic: exp(gamma*log(.))

    loss = mod * (-jnp.log(pt))
    if use_alpha:
        loss = jnp.where(is_pos, alpha_pos, alpha_neg) * loss

    def accumulate(vals):
        # (br,128) -> (br//8, 8, 128) follows the (8,128) vreg tiling, so the
        # leading-axis sum lowers to plain VPU vector adds (no XLU).
        out_ref[...] += jnp.sum(vals.reshape(-1, 8, _LANES), axis=0)

    # Interior blocks are fully valid and skip the mask; only the ragged edge
    # block (and a clamped phantom step when the block count splits unevenly)
    # pays for the iota/compare/select.
    gblock = s * blocks_per_split + b
    start = gblock * (block_rows * _LANES)        # global element offset
    fully_valid = start + block_rows * _LANES <= n_valid

    @pl.when(fully_valid)
    def _():
        accumulate(loss)

    @pl.when(jnp.logical_not(fully_valid))
    def _():
        row = lax.broadcasted_iota(jnp.int32, loss.shape, 0)
        lane = lax.broadcasted_iota(jnp.int32, loss.shape, 1)
        gidx = start + row * _LANES + lane
        accumulate(jnp.where(gidx < n_valid, loss, 0.0))


def binary_focal_loss(inputs, targets, *, alpha=None, gamma=0.5,
                      reduction="mean", block_rows=_DEFAULT_BLOCK_ROWS):
    """Pallas TPU implementation of BinaryFocalLoss.forward.

    inputs:  logits, shape (batch, 1) (or any shape; flattened like torch).
    targets: labels with the same number of elements (float/int/bool).

    Caller contract for best HBM efficiency: pass logits as bf16 and targets
    as int8 where acceptable -- the kernel upcasts to f32 in VMEM, so only the
    narrow bytes cross HBM.
    """
    if reduction not in ("mean", "sum"):
        # TODO(synk): reduction='none' needs a vector output path.
        raise ValueError(f"Invalid reduction type: {reduction}")

    x = jnp.asarray(inputs).reshape(-1)           # keep native dtype
    t = jnp.asarray(targets)
    if t.dtype == jnp.bool_:
        t = t.astype(jnp.int8)                    # avoid 1-bit VMEM loads
    t = t.reshape(-1)
    n = x.shape[0]

    rows = pl.cdiv(n, _LANES)
    rows_alloc = max(rows, 32)                    # at least one dense block

    # Block rows: multiple of 32 (dense f32/bf16/int8 native tiles), sized for
    # >= ~4 grid steps so the input DMAs overlap compute, capped so the
    # double-buffered input pair stays well inside scoped VMEM.
    max_br = max(32, (block_rows // 32) * 32)
    br = min(max_br, max(32, pl.cdiv(rows_alloc, 4)))
    br = ((br + 31) // 32) * 32

    # Lane-remainder padding only; multiple-of-128 element counts reshape with
    # no copy.  (See TODO at top for huge unaligned inputs.)
    pad = rows_alloc * _LANES - n
    if pad:
        x = jnp.pad(x, (0, pad))
        t = jnp.pad(t, (0, pad))
    x2 = x.reshape(rows_alloc, _LANES)
    t2 = t.reshape(rows_alloc, _LANES)

    total_blocks = pl.cdiv(rows_alloc, br)
    num_splits = min(_NUM_SPLITS, total_blocks)
    blocks_per_split = pl.cdiv(total_blocks, num_splits)
    num_splits = pl.cdiv(total_blocks, blocks_per_split)
    last_block = total_blocks - 1

    # alpha handling identical to the torch __init__:
    if alpha is None:
        use_alpha, a_neg, a_pos = False, 1.0, 1.0
    elif isinstance(alpha, (list, tuple)):
        assert len(alpha) == 2, "Alpha must be a list or tuple of length 2."
        use_alpha, a_neg, a_pos = True, float(alpha[0]), float(alpha[1])
    else:
        use_alpha, a_neg, a_pos = True, 1.0 - float(alpha), float(alpha)

    kernel = functools.partial(
        _focal_loss_kernel,
        n_valid=n, block_rows=br, blocks_per_split=blocks_per_split,
        alpha_neg=a_neg, alpha_pos=a_pos, use_alpha=use_alpha,
        gamma=float(gamma))

    def block_map(s, b):
        # Clamp the (at most one) phantom step of an uneven split onto the
        # last real block; its contribution is masked to zero in-kernel.
        return (jnp.minimum(s * blocks_per_split + b, last_block), 0)

    partials = pl.pallas_call(
        kernel,
        out_shape=jax.ShapeDtypeStruct((num_splits * 8, _LANES), jnp.float32),
        grid=(num_splits, blocks_per_split),
        in_specs=[
            pl.BlockSpec((br, _LANES), block_map),
            pl.BlockSpec((br, _LANES), block_map),
        ],
        out_specs=pl.BlockSpec((8, _LANES), lambda s, b: (s, 0)),
        compiler_params=pltpu.CompilerParams(
            dimension_semantics=("parallel", "arbitrary")),
    )(x2, t2)

    # Tiny (num_splits*8, 128) cross-split reduction + reduction scaling.
    total = jnp.sum(partials)
    if reduction == "mean":
        total = total * (1.0 / n)
    return total


def _reference(inputs, targets, *, alpha=None, gamma=0.5, reduction="mean"):
    x = jnp.asarray(inputs, jnp.float32).reshape(-1)
    t = jnp.asarray(targets, jnp.float32).reshape(-1)
    probs = jnp.clip(jax.nn.sigmoid(x), 1e-06, 1.0 - 1e-06)
    pt = jnp.where(t == 1.0, probs, 1.0 - probs)
    if alpha is None:
        at = 1.0
    elif isinstance(alpha, (list, tuple)):
        at = jnp.where(t == 1.0, alpha[1], alpha[0])
    else:
        at = jnp.where(t == 1.0, alpha, 1.0 - alpha)
    loss = -at * (1.0 - pt) ** gamma * jnp.log(pt)
    return loss.mean() if reduction == "mean" else loss.sum()


if __name__ == "__main__":
    key = jax.random.PRNGKey(0)
    k1, k2, k3, k4 = jax.random.split(key, 4)

    batch = 8
    logits = jax.random.normal(k1, (batch, 1), dtype=jnp.float32)
    targets = (jax.random.uniform(k2, (batch, 1)) > 0.5).astype(jnp.float32)

    checks = []
    # Case 1: default module config (alpha=None, gamma=0.5, reduction='mean').
    checks.append((binary_focal_loss(logits, targets),
                   _reference(logits, targets)))
    # Case 2: scalar alpha (exercises the [1-alpha, alpha] balancing path).
    checks.append((binary_focal_loss(logits, targets, alpha=0.25),
                   _reference(logits, targets, alpha=0.25)))
    # Case 3: list alpha + integer gamma + sum reduction.
    checks.append((binary_focal_loss(logits, targets, alpha=[0.3, 0.7],
                                     gamma=2.0, reduction="sum"),
                   _reference(logits, targets, alpha=(0.3, 0.7),
                              gamma=2.0, reduction="sum")))

    # Case 4/5: multi-block two-split path.  n=8325 -> rows=66, br=32,
    # grid=(2,2) with one clamped phantom step and a masked ragged edge;
    # also exercises narrow input dtypes (bf16 logits, int8 targets).
    big = 8325
    big_logits = jax.random.normal(k3, (big, 1), dtype=jnp.float32)
    big_targets = (jax.random.uniform(k4, (big, 1)) > 0.5).astype(jnp.int8)
    checks.append((binary_focal_loss(big_logits, big_targets, alpha=0.25),
                   _reference(big_logits, big_targets, alpha=0.25)))
    checks.append((binary_focal_loss(big_logits.astype(jnp.bfloat16),
                                     big_targets, gamma=2.0),
                   _reference(big_logits.astype(jnp.bfloat16), big_targets,
                              gamma=2.0)))

    for got, ref in checks:
        jax.block_until_ready(got)
        assert jnp.allclose(got, ref, rtol=2e-3, atol=2e-4), (got, ref)

    print("KERNEL_OK")
</pallas_src>

<mosaic_0001>
module attributes {stable_mosaic.version = 11 : i64} {
  func.func @_focal_loss_kernel(%arg0: i32, %arg1: i32, %arg2: memref<32x128xf32, #tpu.memory_space<vmem>>, %arg3: memref<32x128xf32, #tpu.memory_space<vmem>>, %arg4: memref<8x128xf32, #tpu.memory_space<vmem>>) attributes {dimension_semantics = [#tpu.dimension_semantics<parallel>, #tpu.dimension_semantics<arbitrary>], iteration_bounds = array<i64: 1, 1>, scalar_prefetch = 0 : i64, scratch_operands = 0 : i64, tpu.core_type = #tpu.core_type<tc>, window_params = [{transform_indices = @transform_0, window_bounds = array<i64: 32, 128>}, {transform_indices = @transform_1, window_bounds = array<i64: 32, 128>}, {transform_indices = @transform_2, window_bounds = array<i64: 8, 128>}]} {
    %c0_i32 = arith.constant 0 : i32
    %0 = arith.cmpi eq, %arg1, %c0_i32 : i32
    %1 = arith.extui %0 : i1 to i32
    %c0_i32_0 = arith.constant 0 : i32
    %2 = arith.cmpi ne, %1, %c0_i32_0 : i32
    scf.if %2 {
      %cst_14 = arith.constant 0.000000e+00 : f32
      %37 = vector.broadcast %cst_14 : f32 to vector<8x128xf32>
      %c0_15 = arith.constant 0 : index
      %c0_16 = arith.constant 0 : index
      %38 = vector.load %arg4[%c0_15, %c0_16] : memref<8x128xf32, #tpu.memory_space<vmem>>, vector<8x128xf32>
      tpu.vector_store %arg4[%c0_15, %c0_16], %37 {strides = array<i32>} : memref<8x128xf32, #tpu.memory_space<vmem>>, vector<8x128xf32>,
    } else {
    }
    %c0 = arith.constant 0 : index
    %c0_1 = arith.constant 0 : index
    %3 = vector.load %arg2[%c0, %c0_1] : memref<32x128xf32, #tpu.memory_space<vmem>>, vector<32x128xf32>
    %c0_2 = arith.constant 0 : index
    %c0_3 = arith.constant 0 : index
    %4 = vector.load %arg3[%c0_2, %c0_3] : memref<32x128xf32, #tpu.memory_space<vmem>>, vector<32x128xf32>
    %cst = arith.constant 0.000000e+00 : f32
    %5 = vector.broadcast %cst : f32 to vector<32x128xf32>
    %6 = arith.subf %5, %3 : vector<32x128xf32>
    %7 = math.exp %6 : vector<32x128xf32>
    %cst_4 = arith.constant 1.000000e+00 : f32
    %8 = vector.broadcast %cst_4 : f32 to vector<32x128xf32>
    %9 = arith.addf %8, %7 : vector<32x128xf32>
    %10 = tpu.reciprocal %9 {approx = true} : vector<32x128xf32> -> vector<32x128xf32>
    %cst_5 = arith.constant 9.99999997E-7 : f32
    %cst_6 = arith.constant 0.999998986 : f32
    %11 = vector.broadcast %cst_5 : f32 to vector<32x128xf32>
    %12 = arith.maximumf %11, %10 : vector<32x128xf32>
    %13 = vector.broadcast %cst_6 : f32 to vector<32x128xf32>
    %14 = arith.minimumf %13, %12 : vector<32x128xf32>
    %cst_7 = arith.constant 1.000000e+00 : f32
    %15 = vector.broadcast %cst_7 : f32 to vector<32x128xf32>
    %16 = arith.cmpf oeq, %4, %15 : vector<32x128xf32>
    %cst_8 = arith.constant 1.000000e+00 : f32
    %17 = vector.broadcast %cst_8 : f32 to vector<32x128xf32>
    %18 = arith.subf %17, %14 : vector<32x128xf32>
    %19 = arith.select %16, %14, %18 : vector<32x128xi1>, vector<32x128xf32>
    %cst_9 = arith.constant 1.000000e+00 : f32
    %20 = vector.broadcast %cst_9 : f32 to vector<32x128xf32>
    %21 = arith.subf %20, %19 : vector<32x128xf32>
    %22 = math.sqrt %21 : vector<32x128xf32>
    %23 = math.log %19 : vector<32x128xf32>
    %cst_10 = arith.constant 0.000000e+00 : f32
    %24 = vector.broadcast %cst_10 : f32 to vector<32x128xf32>
    %25 = arith.subf %24, %23 : vector<32x128xf32>
    %26 = arith.mulf %22, %25 : vector<32x128xf32>
    %c1_i32 = arith.constant 1 : i32
    %27 = arith.muli %arg0, %c1_i32 : i32
    %28 = arith.addi %27, %arg1 : i32
    %c4096_i32 = arith.constant 4096 : i32
    %29 = arith.muli %28, %c4096_i32 : i32
    %c4096_i32_11 = arith.constant 4096 : i32
    %30 = arith.addi %29, %c4096_i32_11 : i32
    %c8_i32 = arith.constant 8 : i32
    %31 = arith.cmpi sle, %30, %c8_i32 : i32
    %32 = arith.extui %31 : i1 to i32
    %c0_i32_12 = arith.constant 0 : i32
    %33 = arith.cmpi ne, %32, %c0_i32_12 : i32
    scf.if %33 {
      %c0_14 = arith.constant 0 : index
      %c0_15 = arith.constant 0 : index
      %37 = vector.load %arg4[%c0_14, %c0_15] : memref<8x128xf32, #tpu.memory_space<vmem>>, vector<8x128xf32>
      %38 = vector.shape_cast %26 : vector<32x128xf32> to vector<4x8x128xf32>
      %cst_16 = arith.constant dense<0.000000e+00> : vector<8x128xf32>
      %39 = vector.multi_reduction <add>, %38, %cst_16 [0] : vector<4x8x128xf32> to vector<8x128xf32>
      %40 = arith.addf %37, %39 : vector<8x128xf32>
      %c0_17 = arith.constant 0 : index
      %c0_18 = arith.constant 0 : index
      %41 = vector.load %arg4[%c0_17, %c0_18] : memref<8x128xf32, #tpu.memory_space<vmem>>, vector<8x128xf32>
      tpu.vector_store %arg4[%c0_17, %c0_18], %40 {strides = array<i32>} : memref<8x128xf32, #tpu.memory_space<vmem>>, vector<8x128xf32>,
    } else {
    }
    %true = arith.constant true
    %34 = arith.xori %31, %true : i1
    %35 = arith.extui %34 : i1 to i32
    %c0_i32_13 = arith.constant 0 : i32
    %36 = arith.cmpi ne, %35, %c0_i32_13 : i32
    scf.if %36 {
      %37 = tpu.iota {dimensions = array<i32: 0>} : vector<32x128xi32>
      %38 = tpu.iota {dimensions = array<i32: 1>} : vector<32x128xi32>
      %c128_i32 = arith.constant 128 : i32
      %39 = vector.broadcast %c128_i32 : i32 to vector<32x128xi32>
      %40 = arith.muli %37, %39 : vector<32x128xi32>
      %41 = vector.broadcast %29 : i32 to vector<32x128xi32>
      %42 = arith.addi %41, %40 : vector<32x128xi32>
      %43 = arith.addi %42, %38 : vector<32x128xi32>
      %c8_i32_14 = arith.constant 8 : i32
      %44 = vector.broadcast %c8_i32_14 : i32 to vector<32x128xi32>
      %45 = arith.cmpi slt, %43, %44 : vector<32x128xi32>
      %cst_15 = arith.constant 0.000000e+00 : f32
      %46 = vector.broadcast %cst_15 : f32 to vector<32x128xf32>
      %47 = arith.select %45, %26, %46 : vector<32x128xi1>, vector<32x128xf32>
      %c0_16 = arith.constant 0 : index
      %c0_17 = arith.constant 0 : index
      %48 = vector.load %arg4[%c0_16, %c0_17] : memref<8x128xf32, #tpu.memory_space<vmem>>, vector<8x128xf32>
      %49 = vector.shape_cast %47 : vector<32x128xf32> to vector<4x8x128xf32>
      %cst_18 = arith.constant dense<0.000000e+00> : vector<8x128xf32>
      %50 = vector.multi_reduction <add>, %49, %cst_18 [0] : vector<4x8x128xf32> to vector<8x128xf32>
      %51 = arith.addf %48, %50 : vector<8x128xf32>
      %c0_19 = arith.constant 0 : index
      %c0_20 = arith.constant 0 : index
      %52 = vector.load %arg4[%c0_19, %c0_20] : memref<8x128xf32, #tpu.memory_space<vmem>>, vector<8x128xf32>
      tpu.vector_store %arg4[%c0_19, %c0_20], %51 {strides = array<i32>} : memref<8x128xf32, #tpu.memory_space<vmem>>, vector<8x128xf32>,
    } else {
    }
    return
  }
  func.func @transform_0(%arg0: i32, %arg1: i32) -> (i32, i32) {
    %c1_i32 = arith.constant 1 : i32
    %0 = arith.muli %arg0, %c1_i32 : i32
    %1 = arith.addi %0, %arg1 : i32
    %c0_i32 = arith.constant 0 : i32
    %2 = arith.minsi %1, %c0_i32 : i32
    %c0_i32_0 = arith.constant 0 : i32
    %c0_i32_1 = arith.constant 0 : i32
    return %2, %c0_i32_0 : i32, i32
  }
  func.func @transform_1(%arg0: i32, %arg1: i32) -> (i32, i32) {
    %c1_i32 = arith.constant 1 : i32
    %0 = arith.muli %arg0, %c1_i32 : i32
    %1 = arith.addi %0, %arg1 : i32
    %c0_i32 = arith.constant 0 : i32
    %2 = arith.minsi %1, %c0_i32 : i32
    %c0_i32_0 = arith.constant 0 : i32
    %c0_i32_1 = arith.constant 0 : i32
    return %2, %c0_i32_0 : i32, i32
  }
  func.func @transform_2(%arg0: i32, %arg1: i32) -> (i32, i32) {
    %c0_i32 = arith.constant 0 : i32
    %c0_i32_0 = arith.constant 0 : i32
    return %arg0, %c0_i32 : i32, i32
  }
}

</mosaic_0001>

<llo_original>
// kernel: tpu_custom_call.1
$region0: #{tpu_custom_call.1}
  #allocation0 [shape = 'u32[]', space=smem, size = 0x4, offset = 0x4, fixed_abs, tag = 'smem constant byte address 0x4 - core index']
  #allocation1 [shape = 'u32[72,128]{1,0:T(1,128)}', space=vmem, size = 0x9000, scoped, tag = 'internal scratch']
  %s0 = inlined_call_operand.hbm [shape: f32[32,128], index: 0, kind: input, shape index: {}]
  %s1 = inlined_call_operand.hbm [shape: f32[32,128], index: 1, kind: input, shape index: {}]
  %s2 = inlined_call_operand.hbm [shape: f32[8,128], index: 2, kind: output, shape index: {}]
  %s3 = sld [smem:[#allocation0]]
  $region38: #{tpu_custom_call.1} parent=0
    _
  %s5 = ssub.s32 1, %s3
  %s6 = scalar_select 0, %s5, %s3
  $region1: #{tpu_custom_call.1} parent=0
    #allocation2 [shape = 'u8[16384]{0}', space=vmem, size = 0x4000, scoped, tag = 'input window, operand 0, single buffered']
    #allocation3 [shape = 's32[1]{0}', space=sflag, size = 0x4, scoped, tag = 'scoped memory for tpu_custom_call.1']
    #allocation4 [shape = 's32[1]{0}', space=sflag, size = 0x4, scoped, tag = 'scoped memory for tpu_custom_call.1']
    #allocation5 [shape = 'u8[16384]{0}', space=vmem, size = 0x4000, scoped, tag = 'input window, operand 1, single buffered']
    #allocation6 [shape = 's32[1]{0}', space=sflag, size = 0x4, scoped, tag = 'scoped memory for tpu_custom_call.1']
    #allocation7 [shape = 'u8[4096]{0}', space=vmem, size = 0x1000, scoped, tag = 'output window, operand 0, single buffered']
    %7 = vsyncpa [#allocation3], 0
    %8 = vsyncpa [#allocation6], 0
    %9 = vsyncpa [#allocation4], 0
    // Predicated region
    $region2: #{tpu_custom_call.1} parent=1 // pred_check
      _
    $region3: #{tpu_custom_call.1} parent=1 // pred_check_branch
      %11 = sbr.rel (0) target = $region5
    $region4: #{tpu_custom_call.1} parent=1 // pred_region
      %s12 = sadd.s32 0, 0
      %p13 = scmp.lt.s32.totalorder %s12, 0
      %s14 = scalar_select %p13, %s12, 0
      %s15 = smul.u32 4, %s14
      %17 = vsyncadd [#allocation3], 0
      %s18 = smul.addr %s15, 8
      %s19 = scalar_lea.hbm %s0, %s18
      %s20 = sshll.u32 %s19, 4
      %s21 = int_to_ptr.hbm [resolvable:$true] %s20
      %s22 = sshll.u32 [#allocation2], 4
      %s23 = int_to_ptr.vmem [resolvable:$true] %s22
      %28 = dma.hbm_to_vmem [thread:$0]  %s21, 512, %s23, [#allocation3], 128, 128, 8
    $region5: #{tpu_custom_call.1} parent=1 // pred_fallthru
      _
    // Predicated region
    $region6: #{tpu_custom_call.1} parent=1 // pred_check
      _
    $region7: #{tpu_custom_call.1} parent=1 // pred_check_branch
      %30 = sbr.rel (0) target = $region9
    $region8: #{tpu_custom_call.1} parent=1 // pred_region
      %s31 = sadd.s32 0, 0
      %p32 = scmp.lt.s32.totalorder %s31, 0
      %s33 = scalar_select %p32, %s31, 0
      %s34 = smul.u32 4, %s33
      %36 = vsyncadd [#allocation6], 0
      %s37 = smul.addr %s34, 8
      %s38 = scalar_lea.hbm %s1, %s37
      %s39 = sshll.u32 %s38, 4
      %s40 = int_to_ptr.hbm [resolvable:$true] %s39
      %s41 = sshll.u32 [#allocation5], 4
      %s42 = int_to_ptr.vmem [resolvable:$true] %s41
      %47 = dma.hbm_to_vmem [thread:$0]  %s40, 512, %s42, [#allocation6], 128, 128, 8
    $region9: #{tpu_custom_call.1} parent=1 // pred_fallthru
      _
    // Predicated region
    $region10: #{tpu_custom_call.1} parent=1 // pred_check
      _
    $region11: #{tpu_custom_call.1} parent=1 // pred_check_branch
      %49 = sbr.rel (0) target = $region13
    $region12: #{tpu_custom_call.1} parent=1 // pred_region
      %51 = dma.done [#allocation3], 512
    $region13: #{tpu_custom_call.1} parent=1 // pred_fallthru
      _
    // Predicated region
    $region14: #{tpu_custom_call.1} parent=1 // pred_check
      _
    $region15: #{tpu_custom_call.1} parent=1 // pred_check_branch
      %53 = sbr.rel (0) target = $region17
    $region16: #{tpu_custom_call.1} parent=1 // pred_region
      %55 = dma.done [#allocation6], 512
    $region17: #{tpu_custom_call.1} parent=1 // pred_fallthru
      _
    %s56 = sadd.s32 0, 0
    %p57 = scmp.lt.s32.totalorder %s56, 0
    %s58 = scalar_select %p57, %s56, 0
    %s59 = smul.u32 4, %s58
    %s60 = sadd.s32 0, 0
    %p61 = scmp.lt.s32.totalorder %s60, 0
    %s62 = scalar_select %p61, %s60, 0
    %s63 = smul.u32 4, %s62
    %p64 = scmp.eq.s32.totalorder 0, 0
    // Predicated region
    $region18: #{tpu_custom_call.1} parent=1 // pred_check
      %p65 = pneg %p64
    $region19: #{tpu_custom_call.1} parent=1 // pred_check_branch
      %67 = sbr.rel (%p65) target = $region21
    $region20: #{tpu_custom_call.1} parent=1 // pred_region
      %68 = vst [vmem:[#allocation7] sm:$0xff] 0.0
    $region21: #{tpu_custom_call.1} parent=1 // pred_fallthru
      _
    %v69 = vld [vmem:[#allocation2] sm:$0xff]
    %v70 = vld [vmem:[#allocation2 + $0x8] sm:$0xff]
    %v71 = vld [vmem:[#allocation2 + $0x10] sm:$0xff]
    %v72 = vld [vmem:[#allocation2 + $0x18] sm:$0xff]
    %v73 = vld [vmem:[#allocation5] sm:$0xff]
    %v74 = vld [vmem:[#allocation5 + $0x8] sm:$0xff]
    %v75 = vld [vmem:[#allocation5 + $0x10] sm:$0xff]
    %v76 = vld [vmem:[#allocation5 + $0x18] sm:$0xff]
    %v77 = vsub.f32 0.0, %v69
    %v78 = vsub.f32 0.0, %v70
    %v79 = vsub.f32 0.0, %v71
    %v80 = vsub.f32 0.0, %v72
    %v81 = vmul.f32 %v77, 1.442695
    %v82 = vpow.pop %v81
    %v83 = vmul.f32 %v78, 1.442695
    %v84 = vpow.pop %v83
    %v85 = vmul.f32 %v79, 1.442695
    %v86 = vpow.pop %v85
    %v87 = vmul.f32 %v80, 1.442695
    %v88 = vpow.pop %v87
    %v89 = vadd.f32 %v82, 1.0
    %v90 = vadd.f32 %v84, 1.0
    %v91 = vadd.f32 %v86, 1.0
    %v92 = vadd.f32 %v88, 1.0
    %v93 = vrcp.pop %v89
    %v94 = vrcp.pop %v90
    %v95 = vrcp.pop %v91
    %v96 = vrcp.pop %v92
    %v97 = vmax.f32 %v93, 1e-06
    %v98 = vmax.f32 %v94, 1e-06
    %v99 = vmax.f32 %v95, 1e-06
    %v100 = vmax.f32 %v96, 1e-06
    %v101 = vmin.f32 %v97, 0.999999
    %v102 = vmin.f32 %v98, 0.999999
    %v103 = vmin.f32 %v99, 0.999999
    %v104 = vmin.f32 %v100, 0.999999
    %vm105 = vcmp.eq.f32.partialorder %v73, 1.0
    %vm106 = vcmp.eq.f32.partialorder %v74, 1.0
    %vm107 = vcmp.eq.f32.partialorder %v75, 1.0
    %vm108 = vcmp.eq.f32.partialorder %v76, 1.0
    %v109 = vsub.f32 1.0, %v101
    %v110 = vsub.f32 1.0, %v102
    %v111 = vsub.f32 1.0, %v103
    %v112 = vsub.f32 1.0, %v104
    %v113 = vsel %vm105, %v101, %v109
    %v114 = vsel %vm106, %v102, %v110
    %v115 = vsel %vm107, %v103, %v111
    %v116 = vsel %vm108, %v104, %v112
    %v117 = vsub.f32 1.0, %v113
    %v118 = vsub.f32 1.0, %v114
    %v119 = vsub.f32 1.0, %v115
    %v120 = vsub.f32 1.0, %v116
    %v121 = vrsqrt.pop %v117
    %v122 = vmul.f32 %v121, %v117
    %v123 = vmul.f32 %v122, %v121
    %v124 = vmul.f32 0.5, %v123
    %v125 = vsub.f32 1.5, %v124
    %v126 = vmul.f32 %v121, %v125
    %v127 = vmul.f32 %v117, %v126
    %vm128 = vcmp.eq.f32.partialorder %v117, inf
    %v129 = vsel %vm128, %v117, %v127
    %vm130 = vcmp.eq.f32.partialorder %v117, 0.0
    %v131 = vand.u32 %v117, 2147483648
    %v132 = vsel %vm130, %v131, %v129
    %v133 = vrsqrt.pop %v118
    %v134 = vmul.f32 %v133, %v118
    %v135 = vmul.f32 %v134, %v133
    %v136 = vmul.f32 0.5, %v135
    %v137 = vsub.f32 1.5, %v136
    %v138 = vmul.f32 %v133, %v137
    %v139 = vmul.f32 %v118, %v138
    %vm140 = vcmp.eq.f32.partialorder %v118, inf
    %v141 = vsel %vm140, %v118, %v139
    %vm142 = vcmp.eq.f32.partialorder %v118, 0.0
    %v143 = vand.u32 %v118, 2147483648
    %v144 = vsel %vm142, %v143, %v141
    %v145 = vrsqrt.pop %v119
    %v146 = vmul.f32 %v145, %v119
    %v147 = vmul.f32 %v146, %v145
    %v148 = vmul.f32 0.5, %v147
    %v149 = vsub.f32 1.5, %v148
    %v150 = vmul.f32 %v145, %v149
    %v151 = vmul.f32 %v119, %v150
    %vm152 = vcmp.eq.f32.partialorder %v119, inf
    %v153 = vsel %vm152, %v119, %v151
    %vm154 = vcmp.eq.f32.partialorder %v119, 0.0
    %v155 = vand.u32 %v119, 2147483648
    %v156 = vsel %vm154, %v155, %v153
    %v157 = vrsqrt.pop %v120
    %v158 = vmul.f32 %v157, %v120
    %v159 = vmul.f32 %v158, %v157
    %v160 = vmul.f32 0.5, %v159
    %v161 = vsub.f32 1.5, %v160
    %v162 = vmul.f32 %v157, %v161
    %v163 = vmul.f32 %v120, %v162
    %vm164 = vcmp.eq.f32.partialorder %v120, inf
    %v165 = vsel %vm164, %v120, %v163
    %vm166 = vcmp.eq.f32.partialorder %v120, 0.0
    %v167 = vand.u32 %v120, 2147483648
    %v168 = vsel %vm166, %v167, %v165
    %v169 = vlog2.pop %v113
    %v170 = vmul.f32 %v169, 0.6931472
    %v171 = vlog2.pop %v114
    %v172 = vmul.f32 %v171, 0.6931472
    %v173 = vlog2.pop %v115
    %v174 = vmul.f32 %v173, 0.6931472
    %v175 = vlog2.pop %v116
    %v176 = vmul.f32 %v175, 0.6931472
    %v177 = vsub.f32 0.0, %v170
    %v178 = vsub.f32 0.0, %v172
    %v179 = vsub.f32 0.0, %v174
    %v180 = vsub.f32 0.0, %v176
    %v181 = vmul.f32 %v132, %v177
    %v182 = vmul.f32 %v144, %v178
    %v183 = vmul.f32 %v156, %v179
    %v184 = vmul.f32 %v168, %v180
    %s185 = sadd.s32 0, 0
    %s186 = smul.u32 %s185, 4096
    %s187 = sadd.s32 %s186, 4096
    %p188 = scmp.le.s32.totalorder %s187, 8
    // Predicated region
    $region22: #{tpu_custom_call.1} parent=1 // pred_check
      %p189 = pneg %p188
    $region23: #{tpu_custom_call.1} parent=1 // pred_check_branch
      %191 = sbr.rel (%p189) target = $region25
    $region24: #{tpu_custom_call.1} parent=1 // pred_region
      %v192 = vld [vmem:[#allocation7] sm:$0xff]
      %v193 = vadd.f32 %v181, %v182
      %v194 = vadd.f32 %v193, %v183
      %v195 = vadd.f32 %v194, %v184
      %v196 = vadd.f32 %v192, %v195
      %197 = vst [vmem:[#allocation7] sm:$0xff] %v196
    $region25: #{tpu_custom_call.1} parent=1 // pred_fallthru
      _
    %p198 = scmp.gt.s32.totalorder %s187, 8
    // Predicated region
    $region26: #{tpu_custom_call.1} parent=1 // pred_check
      %p199 = pneg %p198
    $region27: #{tpu_custom_call.1} parent=1 // pred_check_branch
      %201 = sbr.rel (%p199) target = $region29
    $region28: #{tpu_custom_call.1} parent=1 // pred_region
      %v202 = vlaneseq
      %v203 = vshrl.u32 %v202, 7
      %v204 = vadd.s32 %v203, 8
      %v205 = vadd.s32 %v203, 16
      %v206 = vadd.s32 %v203, 24
      %v207 = vlaneseq
      %v208 = vand.u32 %v207, 127
      %v209 = vmul.u32 %v203, 128
      %v210 = vmul.u32 %v204, 128
      %v211 = vmul.u32 %v205, 128
      %v212 = vmul.u32 %v206, 128
      %v213 = vstv %s186
      %v214 = vadd.s32 %v213, %v209
      %v215 = vadd.s32 %v213, %v210
      %v216 = vadd.s32 %v213, %v211
      %v217 = vadd.s32 %v213, %v212
      %v218 = vadd.s32 %v214, %v208
      %v219 = vadd.s32 %v215, %v208
      %v220 = vadd.s32 %v216, %v208
      %v221 = vadd.s32 %v217, %v208
      %vm222 = vcmp.lt.s32.totalorder %v218, 8
      %vm223 = vcmp.lt.s32.totalorder %v219, 8
      %vm224 = vcmp.lt.s32.totalorder %v220, 8
      %vm225 = vcmp.lt.s32.totalorder %v221, 8
      %v226 = vsel %vm222, %v181, 0.0
      %v227 = vsel %vm223, %v182, 0.0
      %v228 = vsel %vm224, %v183, 0.0
      %v229 = vsel %vm225, %v184, 0.0
      %v230 = vld [vmem:[#allocation7] sm:$0xff]
      %v231 = vadd.f32 %v226, %v227
      %v232 = vadd.f32 %v231, %v228
      %v233 = vadd.f32 %v232, %v229
      %v234 = vadd.f32 %v230, %v233
      %235 = vst [vmem:[#allocation7] sm:$0xff] %v234
    $region29: #{tpu_custom_call.1} parent=1 // pred_fallthru
      _
    // Predicated region
    $region30: #{tpu_custom_call.1} parent=1 // pred_check
      _
    $region31: #{tpu_custom_call.1} parent=1 // pred_check_branch
      %237 = sbr.rel (0) target = $region33
    $region32: #{tpu_custom_call.1} parent=1 // pred_region
      %239 = vsyncadd [#allocation4], 0
      %s241 = sshll.u32 [#allocation7], 4
      %s242 = int_to_ptr.vmem [resolvable:$true] %s241
      %s243 = sshll.u32 %s2, 4
      %s244 = int_to_ptr.hbm [resolvable:$true] %s243
      %246 = dma.vmem_to_hbm [thread:$0]  %s242, 128, %s244, [#allocation4]
    $region33: #{tpu_custom_call.1} parent=1 // pred_fallthru
      _
    // Predicated region
    $region34: #{tpu_custom_call.1} parent=1 // pred_check
      _
    $region35: #{tpu_custom_call.1} parent=1 // pred_check_branch
      %248 = sbr.rel (0) target = $region37
    $region36: #{tpu_custom_call.1} parent=1 // pred_region
      %250 = dma.done [#allocation4], 128
    $region37: #{tpu_custom_call.1} parent=1 // pred_fallthru
      _
    %251 = vsyncpa [#allocation3], 1
    %252 = vsyncpa [#allocation6], 1
    %253 = vsyncpa [#allocation4], 1

</llo_original>
